<compile_context>
chip_gen: v5e
topology: v5e:2x2
jax: 0.10.0
libtpu: 0.0.40
codegen_flags: <defaults>
</compile_context>

<pallas_src>
import jax
import jax.numpy as jnp
from jax import lax
from jax.experimental import pallas as pl
from jax.experimental.pallas import tpu as pltpu

# (in_features, out_features) for each Linear, in order.
LAYER_DIMS = [(21, 32), (32, 64), (64, 128), (128, 64),
              (64, 32), (32, 16), (16, 8), (8, 1)]
NUM_LAYERS = len(LAYER_DIMS)
IN_FEATURES = LAYER_DIMS[0][0]                  # 21
MAX_IN = max(fi for fi, _fo in LAYER_DIMS)      # 128 (weight-slab lane width)

# Sublane-aligned (multiple-of-8) row offsets of each layer inside the packed
# weight / bias slabs (rows indexed by the layer's *output* features).
_ROW_OFFS = []
_off = 0
for (_fi, _fo) in LAYER_DIMS:
    _ROW_OFFS.append(_off)
    _off += max(8, ((_fo + 7) // 8) * 8)
SLAB_ROWS = _off                                # 352

LANE = 128
MAX_TILE_B = 2048                               # sweep point in the 1024-4096 range


def _round_up(n, m):
    return ((n + m - 1) // m) * m


def _choose_tile_b(batch):
    """Pick a large, 128-aligned batch tile.

    Big tiles amortize per-step overhead and MXU weight reloads; when the
    padded batch splits evenly we prefer >= 2 grid steps so v7x's two
    TensorCores both get work (single-TC chips are indifferent)."""
    padded_min = _round_up(max(batch, 1), LANE)
    if padded_min <= MAX_TILE_B:
        if padded_min >= 2 * LANE and padded_min % (2 * LANE) == 0:
            return padded_min // 2              # exactly 2 full tiles
        return padded_min                       # one tile, no extra padding
    return MAX_TILE_B


def _mlp_kernel(x_ref, w_ref, b_ref, o_ref):
    """Fused MLP for one batch tile (feature-major after layer 1).

    x_ref : (TILE_B, 21)    batch-major input tile (no wrapper transpose)
    w_ref : (352, 128)      all 8 weights packed, sublane-aligned rows (resident)
    b_ref : (352, 1)        all 8 biases packed, sublane-aligned rows (resident)
    o_ref : (1, TILE_B)     lane-dense output row
    """
    h = None
    for k, (fi, fo) in enumerate(LAYER_DIMS):
        off = _ROW_OFFS[k]
        w = w_ref[off:off + fo, 0:fi]           # (fo, fi), static slice
        b = b_ref[off:off + fo, :]              # (fo, 1),  static slice
        if k == 0:
            # (fo, fi) . (TILE_B, fi)^T -> (fo, TILE_B): trans-B contraction
            # puts batch on the lane axis with no in-kernel transpose.
            h = lax.dot_general(w, x_ref[...],
                                (((1,), (1,)), ((), ())),
                                preferred_element_type=jnp.float32)
        else:
            h = jnp.dot(w, h, preferred_element_type=jnp.float32)
        h = h + b                               # bias column broadcast over lanes
        if k < NUM_LAYERS - 1:
            h = jnp.maximum(h, 0.0)             # ReLU on hidden layers
        else:
            h = jax.nn.sigmoid(h)               # Sigmoid on the final layer
    o_ref[...] = h.astype(o_ref.dtype)          # (1, TILE_B) lane-dense store


def lmconfig_forward(x, params, tile_b=None):
    """x: (batch, 21).  params: list of (W (out,in), b (out,)) per layer.

    Returns (batch, 1) float32 in [0, 1]."""
    batch = x.shape[0]
    assert x.shape[1] == IN_FEATURES, x.shape
    if tile_b is None:
        tile_b = _choose_tile_b(batch)
    assert tile_b % LANE == 0, "tile_b must be a multiple of 128 (lane axis)"

    num_tiles = pl.cdiv(batch, tile_b)
    padded = num_tiles * tile_b

    x = x.astype(jnp.float32)
    if padded != batch:                          # pad tail rows only (no transpose)
        x = jnp.pad(x, ((0, padded - batch), (0, 0)))

    # Pack weights & biases into single sublane-aligned, VMEM-resident slabs.
    w_slab = jnp.zeros((SLAB_ROWS, MAX_IN), jnp.float32)
    b_slab = jnp.zeros((SLAB_ROWS, 1), jnp.float32)
    for off, (w, b) in zip(_ROW_OFFS, params):
        fo, fi = w.shape
        w_slab = w_slab.at[off:off + fo, 0:fi].set(w.astype(jnp.float32))
        b_slab = b_slab.at[off:off + fo, 0].set(b.astype(jnp.float32))

    flops = 2 * sum(fi * fo for fi, fo in LAYER_DIMS) * padded
    bytes_accessed = 4 * (padded * IN_FEATURES + padded
                          + int(w_slab.size) + int(b_slab.size))

    out = pl.pallas_call(
        _mlp_kernel,
        out_shape=jax.ShapeDtypeStruct((1, padded), jnp.float32),
        grid=(num_tiles,),
        in_specs=[
            pl.BlockSpec((tile_b, IN_FEATURES), lambda i: (i, 0)),   # x (pipelined)
            pl.BlockSpec((SLAB_ROWS, MAX_IN), lambda i: (0, 0)),     # weights (resident)
            pl.BlockSpec((SLAB_ROWS, 1), lambda i: (0, 0)),          # biases  (resident)
        ],
        out_specs=pl.BlockSpec((1, tile_b), lambda i: (0, i)),
        compiler_params=pltpu.CompilerParams(
            dimension_semantics=("parallel",)),
        cost_estimate=pl.CostEstimate(
            flops=flops, transcendentals=padded,
            bytes_accessed=bytes_accessed),
    )(x, w_slab, b_slab)

    return out[0, :batch].reshape(batch, 1)


def init_params(key):
    """Deterministic synthetic init (PyTorch-Linear-style uniform bounds)."""
    params = []
    for (fan_in, fan_out) in LAYER_DIMS:
        key, kw, kb = jax.random.split(key, 3)
        bound = 1.0 / jnp.sqrt(float(fan_in))
        # PyTorch layout: weight (out, in), bias (out,).
        w = jax.random.uniform(kw, (fan_out, fan_in), jnp.float32, -bound, bound)
        b = jax.random.uniform(kb, (fan_out,), jnp.float32, -bound, bound)
        params.append((w, b))
    return params


def reference_forward(x, params):
    """Plain-JAX reference mirroring the PyTorch module semantics."""
    h = x
    for i, (w, b) in enumerate(params):
        h = h @ w.T + b
        h = jnp.maximum(h, 0.0) if i < NUM_LAYERS - 1 else jax.nn.sigmoid(h)
    return h


if __name__ == "__main__":
    key = jax.random.PRNGKey(0)
    key, kx = jax.random.split(key)

    batch = 8
    x = jax.random.normal(kx, (batch, 21), dtype=jnp.float32)
    params = init_params(key)

    out = lmconfig_forward(x, params)
    out = jax.block_until_ready(out)

    ref = reference_forward(x, params)
    assert out.shape == (batch, 1), out.shape
    assert jnp.allclose(out, ref, atol=1e-5, rtol=1e-5), (
        f"max abs err = {float(jnp.max(jnp.abs(out - ref)))}")

    print("KERNEL_OK")
</pallas_src>

<mosaic_0001>
module attributes {stable_mosaic.version = 11 : i64} {
  func.func @_mlp_kernel(%arg0: i32, %arg1: memref<128x21xf32, #tpu.memory_space<vmem>>, %arg2: memref<352x128xf32, #tpu.memory_space<vmem>>, %arg3: memref<352x1xf32, #tpu.memory_space<vmem>>, %arg4: memref<1x128xf32, #tpu.memory_space<vmem>>) attributes {dimension_semantics = [#tpu.dimension_semantics<parallel>], iteration_bounds = array<i64: 1>, scalar_prefetch = 0 : i64, scratch_operands = 0 : i64, tpu.core_type = #tpu.core_type<tc>, window_params = [{transform_indices = @transform_0, window_bounds = array<i64: 128, 21>}, {pipeline_mode = #tpu.pipeline_mode<synchronous>, transform_indices = @transform_1, window_bounds = array<i64: 352, 128>}, {pipeline_mode = #tpu.pipeline_mode<synchronous>, transform_indices = @transform_2, window_bounds = array<i64: 352, 1>}, {transform_indices = @transform_3, window_bounds = array<i64: 1, 128>}]} {
    %c0 = arith.constant 0 : index
    %c0_0 = arith.constant 0 : index
    %0 = vector.load %arg2[%c0, %c0_0] : memref<352x128xf32, #tpu.memory_space<vmem>>, vector<32x21xf32>
    %c0_1 = arith.constant 0 : index
    %c0_2 = arith.constant 0 : index
    %1 = vector.load %arg3[%c0_1, %c0_2] : memref<352x1xf32, #tpu.memory_space<vmem>>, vector<32x1xf32>
    %c0_3 = arith.constant 0 : index
    %c0_4 = arith.constant 0 : index
    %2 = vector.load %arg1[%c0_3, %c0_4] : memref<128x21xf32, #tpu.memory_space<vmem>>, vector<128x21xf32>
    %cst = arith.constant dense<0.000000e+00> : vector<32x128xf32>
    %3 = tpu.matmul %0, %2, %cst {dimension_numbers = #tpu.dot_dimension_numbers<[1], [1], [0], [0], [0, 0, 1, 0], [], []>} : vector<32x21xf32>, vector<128x21xf32>, vector<32x128xf32> -> vector<32x128xf32>
    %4 = vector.broadcast %1 : vector<32x1xf32> to vector<32x128xf32>
    %5 = arith.addf %3, %4 : vector<32x128xf32>
    %cst_5 = arith.constant 0.000000e+00 : f32
    %6 = vector.broadcast %cst_5 : f32 to vector<32x128xf32>
    %7 = arith.maximumf %5, %6 : vector<32x128xf32>
    %c32 = arith.constant 32 : index
    %c0_6 = arith.constant 0 : index
    %8 = vector.load %arg2[%c32, %c0_6] : memref<352x128xf32, #tpu.memory_space<vmem>>, vector<64x32xf32>
    %c32_7 = arith.constant 32 : index
    %c0_8 = arith.constant 0 : index
    %9 = vector.load %arg3[%c32_7, %c0_8] : memref<352x1xf32, #tpu.memory_space<vmem>>, vector<64x1xf32>
    %cst_9 = arith.constant dense<0.000000e+00> : vector<64x128xf32>
    %10 = tpu.matmul %8, %7, %cst_9 {dimension_numbers = #tpu.dot_dimension_numbers<[1], [0], [0], [1], [0, 0, 1, 1], [], []>} : vector<64x32xf32>, vector<32x128xf32>, vector<64x128xf32> -> vector<64x128xf32>
    %11 = vector.broadcast %9 : vector<64x1xf32> to vector<64x128xf32>
    %12 = arith.addf %10, %11 : vector<64x128xf32>
    %cst_10 = arith.constant 0.000000e+00 : f32
    %13 = vector.broadcast %cst_10 : f32 to vector<64x128xf32>
    %14 = arith.maximumf %12, %13 : vector<64x128xf32>
    %c96 = arith.constant 96 : index
    %c0_11 = arith.constant 0 : index
    %15 = vector.load %arg2[%c96, %c0_11] : memref<352x128xf32, #tpu.memory_space<vmem>>, vector<128x64xf32>
    %c96_12 = arith.constant 96 : index
    %c0_13 = arith.constant 0 : index
    %16 = vector.load %arg3[%c96_12, %c0_13] : memref<352x1xf32, #tpu.memory_space<vmem>>, vector<128x1xf32>
    %cst_14 = arith.constant dense<0.000000e+00> : vector<128x128xf32>
    %17 = tpu.matmul %15, %14, %cst_14 {dimension_numbers = #tpu.dot_dimension_numbers<[1], [0], [0], [1], [0, 0, 1, 1], [], []>} : vector<128x64xf32>, vector<64x128xf32>, vector<128x128xf32> -> vector<128x128xf32>
    %18 = vector.broadcast %16 : vector<128x1xf32> to vector<128x128xf32>
    %19 = arith.addf %17, %18 : vector<128x128xf32>
    %cst_15 = arith.constant 0.000000e+00 : f32
    %20 = vector.broadcast %cst_15 : f32 to vector<128x128xf32>
    %21 = arith.maximumf %19, %20 : vector<128x128xf32>
    %c224 = arith.constant 224 : index
    %c0_16 = arith.constant 0 : index
    %22 = vector.load %arg2[%c224, %c0_16] : memref<352x128xf32, #tpu.memory_space<vmem>>, vector<64x128xf32>
    %c224_17 = arith.constant 224 : index
    %c0_18 = arith.constant 0 : index
    %23 = vector.load %arg3[%c224_17, %c0_18] : memref<352x1xf32, #tpu.memory_space<vmem>>, vector<64x1xf32>
    %cst_19 = arith.constant dense<0.000000e+00> : vector<64x128xf32>
    %24 = tpu.matmul %22, %21, %cst_19 {dimension_numbers = #tpu.dot_dimension_numbers<[1], [0], [0], [1], [0, 0, 1, 1], [], []>} : vector<64x128xf32>, vector<128x128xf32>, vector<64x128xf32> -> vector<64x128xf32>
    %25 = vector.broadcast %23 : vector<64x1xf32> to vector<64x128xf32>
    %26 = arith.addf %24, %25 : vector<64x128xf32>
    %cst_20 = arith.constant 0.000000e+00 : f32
    %27 = vector.broadcast %cst_20 : f32 to vector<64x128xf32>
    %28 = arith.maximumf %26, %27 : vector<64x128xf32>
    %c288 = arith.constant 288 : index
    %c0_21 = arith.constant 0 : index
    %29 = vector.load %arg2[%c288, %c0_21] : memref<352x128xf32, #tpu.memory_space<vmem>>, vector<32x64xf32>
    %c288_22 = arith.constant 288 : index
    %c0_23 = arith.constant 0 : index
    %30 = vector.load %arg3[%c288_22, %c0_23] : memref<352x1xf32, #tpu.memory_space<vmem>>, vector<32x1xf32>
    %cst_24 = arith.constant dense<0.000000e+00> : vector<32x128xf32>
    %31 = tpu.matmul %29, %28, %cst_24 {dimension_numbers = #tpu.dot_dimension_numbers<[1], [0], [0], [1], [0, 0, 1, 1], [], []>} : vector<32x64xf32>, vector<64x128xf32>, vector<32x128xf32> -> vector<32x128xf32>
    %32 = vector.broadcast %30 : vector<32x1xf32> to vector<32x128xf32>
    %33 = arith.addf %31, %32 : vector<32x128xf32>
    %cst_25 = arith.constant 0.000000e+00 : f32
    %34 = vector.broadcast %cst_25 : f32 to vector<32x128xf32>
    %35 = arith.maximumf %33, %34 : vector<32x128xf32>
    %c320 = arith.constant 320 : index
    %c0_26 = arith.constant 0 : index
    %36 = vector.load %arg2[%c320, %c0_26] : memref<352x128xf32, #tpu.memory_space<vmem>>, vector<16x32xf32>
    %c320_27 = arith.constant 320 : index
    %c0_28 = arith.constant 0 : index
    %37 = vector.load %arg3[%c320_27, %c0_28] : memref<352x1xf32, #tpu.memory_space<vmem>>, vector<16x1xf32>
    %cst_29 = arith.constant dense<0.000000e+00> : vector<16x128xf32>
    %38 = tpu.matmul %36, %35, %cst_29 {dimension_numbers = #tpu.dot_dimension_numbers<[1], [0], [0], [1], [0, 0, 1, 1], [], []>} : vector<16x32xf32>, vector<32x128xf32>, vector<16x128xf32> -> vector<16x128xf32>
    %39 = vector.broadcast %37 : vector<16x1xf32> to vector<16x128xf32>
    %40 = arith.addf %38, %39 : vector<16x128xf32>
    %cst_30 = arith.constant 0.000000e+00 : f32
    %41 = vector.broadcast %cst_30 : f32 to vector<16x128xf32>
    %42 = arith.maximumf %40, %41 : vector<16x128xf32>
    %c336 = arith.constant 336 : index
    %c0_31 = arith.constant 0 : index
    %43 = vector.load %arg2[%c336, %c0_31] : memref<352x128xf32, #tpu.memory_space<vmem>>, vector<8x16xf32>
    %c336_32 = arith.constant 336 : index
    %c0_33 = arith.constant 0 : index
    %44 = vector.load %arg3[%c336_32, %c0_33] : memref<352x1xf32, #tpu.memory_space<vmem>>, vector<8x1xf32>
    %cst_34 = arith.constant dense<0.000000e+00> : vector<8x128xf32>
    %45 = tpu.matmul %43, %42, %cst_34 {dimension_numbers = #tpu.dot_dimension_numbers<[1], [0], [0], [1], [0, 0, 1, 1], [], []>} : vector<8x16xf32>, vector<16x128xf32>, vector<8x128xf32> -> vector<8x128xf32>
    %46 = vector.broadcast %44 : vector<8x1xf32> to vector<8x128xf32>
    %47 = arith.addf %45, %46 : vector<8x128xf32>
    %cst_35 = arith.constant 0.000000e+00 : f32
    %48 = vector.broadcast %cst_35 : f32 to vector<8x128xf32>
    %49 = arith.maximumf %47, %48 : vector<8x128xf32>
    %c344 = arith.constant 344 : index
    %c0_36 = arith.constant 0 : index
    %50 = vector.load %arg2[%c344, %c0_36] : memref<352x128xf32, #tpu.memory_space<vmem>>, vector<1x8xf32>
    %c344_37 = arith.constant 344 : index
    %c0_38 = arith.constant 0 : index
    %51 = vector.load %arg3[%c344_37, %c0_38] : memref<352x1xf32, #tpu.memory_space<vmem>>, vector<1x1xf32>
    %cst_39 = arith.constant dense<0.000000e+00> : vector<1x128xf32>
    %52 = tpu.matmul %50, %49, %cst_39 {dimension_numbers = #tpu.dot_dimension_numbers<[1], [0], [0], [1], [0, 0, 1, 1], [], []>} : vector<1x8xf32>, vector<8x128xf32>, vector<1x128xf32> -> vector<1x128xf32>
    %53 = vector.broadcast %51 : vector<1x1xf32> to vector<1x128xf32>
    %54 = arith.addf %52, %53 : vector<1x128xf32>
    %55 = arith.negf %54 : vector<1x128xf32>
    %56 = math.exp %55 : vector<1x128xf32>
    %cst_40 = arith.constant 1.000000e+00 : f32
    %57 = vector.broadcast %cst_40 : f32 to vector<1x128xf32>
    %58 = arith.addf %57, %56 : vector<1x128xf32>
    %59 = arith.divf %57, %58 : vector<1x128xf32>
    %c0_41 = arith.constant 0 : index
    %c0_42 = arith.constant 0 : index
    %60 = vector.load %arg4[%c0_41, %c0_42] : memref<1x128xf32, #tpu.memory_space<vmem>>, vector<1x128xf32>
    tpu.vector_store %arg4[%c0_41, %c0_42], %59 {strides = array<i32>} : memref<1x128xf32, #tpu.memory_space<vmem>>, vector<1x128xf32>,
    return
  }
  func.func @transform_0(%arg0: i32) -> (i32, i32) {
    %c0_i32 = arith.constant 0 : i32
    %c0_i32_0 = arith.constant 0 : i32
    return %arg0, %c0_i32 : i32, i32
  }
  func.func @transform_1(%arg0: i32) -> (i32, i32) {
    %c0_i32 = arith.constant 0 : i32
    %c0_i32_0 = arith.constant 0 : i32
    %c0_i32_1 = arith.constant 0 : i32
    return %c0_i32, %c0_i32_0 : i32, i32
  }
  func.func @transform_2(%arg0: i32) -> (i32, i32) {
    %c0_i32 = arith.constant 0 : i32
    %c0_i32_0 = arith.constant 0 : i32
    %c0_i32_1 = arith.constant 0 : i32
    return %c0_i32, %c0_i32_0 : i32, i32
  }
  func.func @transform_3(%arg0: i32) -> (i32, i32) {
    %c0_i32 = arith.constant 0 : i32
    %c0_i32_0 = arith.constant 0 : i32
    return %c0_i32, %arg0 : i32, i32
  }
}

</mosaic_0001>

<llo_original>
// kernel: tpu_custom_call.1
$region0: #{tpu_custom_call.1}
  #allocation0 [shape = 'u32[]', space=smem, size = 0x4, offset = 0x4, fixed_abs, tag = 'smem constant byte address 0x4 - core index']
  #allocation1 [shape = 'u32[72,128]{1,0:T(1,128)}', space=vmem, size = 0x9000, scoped, tag = 'internal scratch']
  %s0 = inlined_call_operand.vmem [shape: f32[128,21], index: 0, kind: input, shape index: {}]
  %s1 = inlined_call_operand.vmem [shape: f32[352,128], index: 1, kind: input, shape index: {}]
  %s2 = inlined_call_operand.vmem [shape: f32[352,1], index: 2, kind: input, shape index: {}]
  %s3 = inlined_call_operand.hbm [shape: f32[1,128], index: 3, kind: output, shape index: {}]
  %s4 = sld [smem:[#allocation0]]
  $region22: #{tpu_custom_call.1} parent=0
    _
  %s6 = ssub.s32 1, %s4
  %s7 = scalar_select 0, %s6, %s4
  $region1: #{tpu_custom_call.1} parent=0
    #allocation2 [shape = 'u8[512]{0}', space=vmem, size = 0x400, scoped, tag = 'output window, operand 0, single buffered']
    #allocation3 [shape = 's32[1]{0}', space=sflag, size = 0x4, scoped, tag = 'scoped memory for tpu_custom_call.1']
    %8 = vsyncpa [#allocation3], 0
    // Predicated region
    $region2: #{tpu_custom_call.1} parent=1 // pred_check
      _
    $region3: #{tpu_custom_call.1} parent=1 // pred_check_branch
      %10 = sbr.rel (0) target = $region5
    $region4: #{tpu_custom_call.1} parent=1 // pred_region
      _
    $region5: #{tpu_custom_call.1} parent=1 // pred_fallthru
      _
    // Predicated region
    $region6: #{tpu_custom_call.1} parent=1 // pred_check
      _
    $region7: #{tpu_custom_call.1} parent=1 // pred_check_branch
      %12 = sbr.rel (0) target = $region9
    $region8: #{tpu_custom_call.1} parent=1 // pred_region
      _
    $region9: #{tpu_custom_call.1} parent=1 // pred_fallthru
      _
    // Predicated region
    $region10: #{tpu_custom_call.1} parent=1 // pred_check
      _
    $region11: #{tpu_custom_call.1} parent=1 // pred_check_branch
      %14 = sbr.rel (0) target = $region13
    $region12: #{tpu_custom_call.1} parent=1 // pred_region
      _
    $region13: #{tpu_custom_call.1} parent=1 // pred_fallthru
      _
    %v15 = vld [vmem:[%s1] sm:$0xff]
    %v16 = vld [vmem:[%s1 + $0x8] sm:$0xff]
    %v17 = vld [vmem:[%s1 + $0x10] sm:$0xff]
    %v18 = vld [vmem:[%s1 + $0x18] sm:$0xff]
    %v19 = vld [vmem:[%s2] sm:$0xff]
    %v20 = vld [vmem:[%s2 + $0x8] sm:$0xff]
    %v21 = vld [vmem:[%s2 + $0x10] sm:$0xff]
    %v22 = vld [vmem:[%s2 + $0x18] sm:$0xff]
    %v23 = vld [vmem:[%s0] sm:$0xff]
    %v24 = vld [vmem:[%s0 + $0x8] sm:$0xff]
    %v25 = vld [vmem:[%s0 + $0x10] sm:$0xff]
    %v26 = vld [vmem:[%s0 + $0x18] sm:$0xff]
    %v27 = vld [vmem:[%s0 + $0x20] sm:$0xff]
    %v28 = vld [vmem:[%s0 + $0x28] sm:$0xff]
    %v29 = vld [vmem:[%s0 + $0x30] sm:$0xff]
    %v30 = vld [vmem:[%s0 + $0x38] sm:$0xff]
    %v31 = vld [vmem:[%s0 + $0x40] sm:$0xff]
    %v32 = vld [vmem:[%s0 + $0x48] sm:$0xff]
    %v33 = vld [vmem:[%s0 + $0x50] sm:$0xff]
    %v34 = vld [vmem:[%s0 + $0x58] sm:$0xff]
    %v35 = vld [vmem:[%s0 + $0x60] sm:$0xff]
    %v36 = vld [vmem:[%s0 + $0x68] sm:$0xff]
    %v37 = vld [vmem:[%s0 + $0x70] sm:$0xff]
    %v38 = vld [vmem:[%s0 + $0x78] sm:$0xff]
    %40 = vset.pattern.permute.xlu0 0
    %41 = vperm.xlu0 %40, %v19
    %v42 = vpop.permute.xlu0 %41
    %45 = vset.pattern.permute.xlu0 0
    %46 = vperm.xlu0 %45, %v20
    %v47 = vpop.permute.xlu0 %46
    %50 = vset.pattern.permute.xlu0 0
    %51 = vperm.xlu0 %50, %v21
    %v52 = vpop.permute.xlu0 %51
    %55 = vset.pattern.permute.xlu0 0
    %56 = vperm.xlu0 %55, %v22
    %v57 = vpop.permute.xlu0 %56
    %vm59 = vcmask 171008
    %v61 = vsel %vm59, %v15, 0
    %v64 = vsel %vm59, %v16, 0
    %v67 = vsel %vm59, %v17, 0
    %v70 = vsel %vm59, %v18, 0
    %v73 = vsel %vm59, %v23, 0
    %v76 = vsel %vm59, %v24, 0
    %v79 = vsel %vm59, %v25, 0
    %v82 = vsel %vm59, %v26, 0
    %v85 = vsel %vm59, %v27, 0
    %v88 = vsel %vm59, %v28, 0
    %v91 = vsel %vm59, %v29, 0
    %v94 = vsel %vm59, %v30, 0
    %v97 = vsel %vm59, %v31, 0
    %v100 = vsel %vm59, %v32, 0
    %v103 = vsel %vm59, %v33, 0
    %v106 = vsel %vm59, %v34, 0
    %v109 = vsel %vm59, %v35, 0
    %v112 = vsel %vm59, %v36, 0
    %v115 = vsel %vm59, %v37, 0
    %v118 = vsel %vm59, %v38, 0
    %120 = vmatpush.xpose.msra.mxu0 %v118
    %121 = vmatpush.xpose.msra.mxu0 %v115
    %122 = vmatpush.xpose.msra.mxu0 %v112
    %123 = vmatpush.xpose.msra.mxu0 %v109
    %124 = vmatpush.xpose.msra.mxu0 %v106
    %125 = vmatpush.xpose.msra.mxu0 %v103
    %126 = vmatpush.xpose.msra.mxu0 %v100
    %127 = vmatpush.xpose.msra.mxu0 %v97
    %128 = vmatpush.xpose.msra.mxu0 %v94
    %129 = vmatpush.xpose.msra.mxu0 %v91
    %130 = vmatpush.xpose.msra.mxu0 %v88
    %131 = vmatpush.xpose.msra.mxu0 %v85
    %132 = vmatpush.xpose.msra.mxu0 %v82
    %133 = vmatpush.xpose.msra.mxu0 %v79
    %134 = vmatpush.xpose.msra.mxu0 %v76
    %135 = vmatpush.xpose.msra.mxu0 %v73
    %136 = vmatmul.f32.gmra.mxu0 %v61
    %v137 = vpop.f32.mrf.mxu0
    %v138 = vadd.f32 %v42, %v137
    %139 = vmatmul.f32.gmra.mxu0 %v64
    %v140 = vpop.f32.mrf.mxu0
    %v141 = vadd.f32 %v47, %v140
    %142 = vmatmul.f32.gmra.mxu0 %v67
    %v143 = vpop.f32.mrf.mxu0
    %v144 = vadd.f32 %v52, %v143
    %145 = vmatmul.f32.gmra.mxu0 %v70
    %v146 = vpop.f32.mrf.mxu0
    %v147 = vadd.f32 %v57, %v146
    %148 = vdwg.mxu0
    %v149 = vmax.f32 %v138, 0.0
    %v150 = vmax.f32 %v141, 0.0
    %v151 = vmax.f32 %v144, 0.0
    %v152 = vmax.f32 %v147, 0.0
    %v153 = vld [vmem:[%s1 + $0x20] sm:$0xff]
    %v154 = vld [vmem:[%s1 + $0x28] sm:$0xff]
    %v155 = vld [vmem:[%s1 + $0x30] sm:$0xff]
    %v156 = vld [vmem:[%s1 + $0x38] sm:$0xff]
    %v157 = vld [vmem:[%s1 + $0x40] sm:$0xff]
    %v158 = vld [vmem:[%s1 + $0x48] sm:$0xff]
    %v159 = vld [vmem:[%s1 + $0x50] sm:$0xff]
    %v160 = vld [vmem:[%s1 + $0x58] sm:$0xff]
    %v161 = vld [vmem:[%s2 + $0x20] sm:$0xff]
    %v162 = vld [vmem:[%s2 + $0x28] sm:$0xff]
    %v163 = vld [vmem:[%s2 + $0x30] sm:$0xff]
    %v164 = vld [vmem:[%s2 + $0x38] sm:$0xff]
    %v165 = vld [vmem:[%s2 + $0x40] sm:$0xff]
    %v166 = vld [vmem:[%s2 + $0x48] sm:$0xff]
    %v167 = vld [vmem:[%s2 + $0x50] sm:$0xff]
    %v168 = vld [vmem:[%s2 + $0x58] sm:$0xff]
    %170 = vset.pattern.permute.xlu0 0
    %171 = vperm.xlu0 %170, %v161
    %v172 = vpop.permute.xlu0 %171
    %175 = vset.pattern.permute.xlu0 0
    %176 = vperm.xlu0 %175, %v162
    %v177 = vpop.permute.xlu0 %176
    %180 = vset.pattern.permute.xlu0 0
    %181 = vperm.xlu0 %180, %v163
    %v182 = vpop.permute.xlu0 %181
    %185 = vset.pattern.permute.xlu0 0
    %186 = vperm.xlu0 %185, %v164
    %v187 = vpop.permute.xlu0 %186
    %190 = vset.pattern.permute.xlu0 0
    %191 = vperm.xlu0 %190, %v165
    %v192 = vpop.permute.xlu0 %191
    %195 = vset.pattern.permute.xlu0 0
    %196 = vperm.xlu0 %195, %v166
    %v197 = vpop.permute.xlu0 %196
    %200 = vset.pattern.permute.xlu0 0
    %201 = vperm.xlu0 %200, %v167
    %v202 = vpop.permute.xlu0 %201
    %205 = vset.pattern.permute.xlu0 0
    %206 = vperm.xlu0 %205, %v168
    %v207 = vpop.permute.xlu0 %206
    %vm209 = vcmask 261120
    %v211 = vsel %vm209, %v153, 0
    %v214 = vsel %vm209, %v154, 0
    %v217 = vsel %vm209, %v155, 0
    %v220 = vsel %vm209, %v156, 0
    %v223 = vsel %vm209, %v157, 0
    %v226 = vsel %vm209, %v158, 0
    %v229 = vsel %vm209, %v159, 0
    %v232 = vsel %vm209, %v160, 0
    %234 = vmatpush.msra.mxu0 0.0
    %235 = vmatpush.msra.mxu0 0.0
    %236 = vmatpush.msra.mxu0 0.0
    %237 = vmatpush.msra.mxu0 0.0
    %238 = vmatpush.msra.mxu0 0.0
    %239 = vmatpush.msra.mxu0 0.0
    %240 = vmatpush.msra.mxu0 0.0
    %241 = vmatpush.msra.mxu0 0.0
    %242 = vmatpush.msra.mxu0 0.0
    %243 = vmatpush.msra.mxu0 0.0
    %244 = vmatpush.msra.mxu0 0.0
    %245 = vmatpush.msra.mxu0 0.0
    %246 = vmatpush.msra.mxu0 %v152
    %247 = vmatpush.msra.mxu0 %v151
    %248 = vmatpush.msra.mxu0 %v150
    %249 = vmatpush.msra.mxu0 %v149
    %250 = vmatmul.f32.gmra.mxu0 %v211
    %v251 = vpop.f32.mrf.mxu0
    %v252 = vadd.f32 %v172, %v251
    %253 = vmatmul.f32.gmra.mxu0 %v214
    %v254 = vpop.f32.mrf.mxu0
    %v255 = vadd.f32 %v177, %v254
    %256 = vmatmul.f32.gmra.mxu0 %v217
    %v257 = vpop.f32.mrf.mxu0
    %v258 = vadd.f32 %v182, %v257
    %259 = vmatmul.f32.gmra.mxu0 %v220
    %v260 = vpop.f32.mrf.mxu0
    %v261 = vadd.f32 %v187, %v260
    %262 = vmatmul.f32.gmra.mxu0 %v223
    %v263 = vpop.f32.mrf.mxu0
    %v264 = vadd.f32 %v192, %v263
    %265 = vmatmul.f32.gmra.mxu0 %v226
    %v266 = vpop.f32.mrf.mxu0
    %v267 = vadd.f32 %v197, %v266
    %268 = vmatmul.f32.gmra.mxu0 %v229
    %v269 = vpop.f32.mrf.mxu0
    %v270 = vadd.f32 %v202, %v269
    %271 = vmatmul.f32.gmra.mxu0 %v232
    %v272 = vpop.f32.mrf.mxu0
    %v273 = vadd.f32 %v207, %v272
    %274 = vdwg.mxu0
    %v275 = vmax.f32 %v252, 0.0
    %v276 = vmax.f32 %v255, 0.0
    %v277 = vmax.f32 %v258, 0.0
    %v278 = vmax.f32 %v261, 0.0
    %v279 = vmax.f32 %v264, 0.0
    %v280 = vmax.f32 %v267, 0.0
    %v281 = vmax.f32 %v270, 0.0
    %v282 = vmax.f32 %v273, 0.0
    %v283 = vld [vmem:[%s1 + $0x60] sm:$0xff]
    %v284 = vld [vmem:[%s1 + $0x68] sm:$0xff]
    %v285 = vld [vmem:[%s1 + $0x70] sm:$0xff]
    %v286 = vld [vmem:[%s1 + $0x78] sm:$0xff]
    %v287 = vld [vmem:[%s1 + $0x80] sm:$0xff]
    %v288 = vld [vmem:[%s1 + $0x88] sm:$0xff]
    %v289 = vld [vmem:[%s1 + $0x90] sm:$0xff]
    %v290 = vld [vmem:[%s1 + $0x98] sm:$0xff]
    %v291 = vld [vmem:[%s1 + $0xa0] sm:$0xff]
    %v292 = vld [vmem:[%s1 + $0xa8] sm:$0xff]
    %v293 = vld [vmem:[%s1 + $0xb0] sm:$0xff]
    %v294 = vld [vmem:[%s1 + $0xb8] sm:$0xff]
    %v295 = vld [vmem:[%s1 + $0xc0] sm:$0xff]
    %v296 = vld [vmem:[%s1 + $0xc8] sm:$0xff]
    %v297 = vld [vmem:[%s1 + $0xd0] sm:$0xff]
    %v298 = vld [vmem:[%s1 + $0xd8] sm:$0xff]
    %v299 = vld [vmem:[%s2 + $0x60] sm:$0xff]
    %v300 = vld [vmem:[%s2 + $0x68] sm:$0xff]
    %v301 = vld [vmem:[%s2 + $0x70] sm:$0xff]
    %v302 = vld [vmem:[%s2 + $0x78] sm:$0xff]
    %v303 = vld [vmem:[%s2 + $0x80] sm:$0xff]
    %v304 = vld [vmem:[%s2 + $0x88] sm:$0xff]
    %v305 = vld [vmem:[%s2 + $0x90] sm:$0xff]
    %v306 = vld [vmem:[%s2 + $0x98] sm:$0xff]
    %v307 = vld [vmem:[%s2 + $0xa0] sm:$0xff]
    %v308 = vld [vmem:[%s2 + $0xa8] sm:$0xff]
    %v309 = vld [vmem:[%s2 + $0xb0] sm:$0xff]
    %v310 = vld [vmem:[%s2 + $0xb8] sm:$0xff]
    %v311 = vld [vmem:[%s2 + $0xc0] sm:$0xff]
    %v312 = vld [vmem:[%s2 + $0xc8] sm:$0xff]
    %v313 = vld [vmem:[%s2 + $0xd0] sm:$0xff]
    %v314 = vld [vmem:[%s2 + $0xd8] sm:$0xff]
    %316 = vset.pattern.permute.xlu0 0
    %317 = vperm.xlu0 %316, %v299
    %v318 = vpop.permute.xlu0 %317
    %321 = vset.pattern.permute.xlu0 0
    %322 = vperm.xlu0 %321, %v300
    %v323 = vpop.permute.xlu0 %322
    %326 = vset.pattern.permute.xlu0 0
    %327 = vperm.xlu0 %326, %v301
    %v328 = vpop.permute.xlu0 %327
    %331 = vset.pattern.permute.xlu0 0
    %332 = vperm.xlu0 %331, %v302
    %v333 = vpop.permute.xlu0 %332
    %336 = vset.pattern.permute.xlu0 0
    %337 = vperm.xlu0 %336, %v303
    %v338 = vpop.permute.xlu0 %337
    %341 = vset.pattern.permute.xlu0 0
    %342 = vperm.xlu0 %341, %v304
    %v343 = vpop.permute.xlu0 %342
    %346 = vset.pattern.permute.xlu0 0
    %347 = vperm.xlu0 %346, %v305
    %v348 = vpop.permute.xlu0 %347
    %351 = vset.pattern.permute.xlu0 0
    %352 = vperm.xlu0 %351, %v306
    %v353 = vpop.permute.xlu0 %352
    %356 = vset.pattern.permute.xlu0 0
    %357 = vperm.xlu0 %356, %v307
    %v358 = vpop.permute.xlu0 %357
    %361 = vset.pattern.permute.xlu0 0
    %362 = vperm.xlu0 %361, %v308
    %v363 = vpop.permute.xlu0 %362
    %366 = vset.pattern.permute.xlu0 0
    %367 = vperm.xlu0 %366, %v309
    %v368 = vpop.permute.xlu0 %367
    %371 = vset.pattern.permute.xlu0 0
    %372 = vperm.xlu0 %371, %v310
    %v373 = vpop.permute.xlu0 %372
    %376 = vset.pattern.permute.xlu0 0
    %377 = vperm.xlu0 %376, %v311
    %v378 = vpop.permute.xlu0 %377
    %381 = vset.pattern.permute.xlu0 0
    %382 = vperm.xlu0 %381, %v312
    %v383 = vpop.permute.xlu0 %382
    %386 = vset.pattern.permute.xlu0 0
    %387 = vperm.xlu0 %386, %v313
    %v388 = vpop.permute.xlu0 %387
    %391 = vset.pattern.permute.xlu0 0
    %392 = vperm.xlu0 %391, %v314
    %v393 = vpop.permute.xlu0 %392
    %vm395 = vcmask 523264
    %v397 = vsel %vm395, %v283, 0
    %v400 = vsel %vm395, %v284, 0
    %v403 = vsel %vm395, %v285, 0
    %v406 = vsel %vm395, %v286, 0
    %v409 = vsel %vm395, %v287, 0
    %v412 = vsel %vm395, %v288, 0
    %v415 = vsel %vm395, %v289, 0
    %v418 = vsel %vm395, %v290, 0
    %v421 = vsel %vm395, %v291, 0
    %v424 = vsel %vm395, %v292, 0
    %v427 = vsel %vm395, %v293, 0
    %v430 = vsel %vm395, %v294, 0
    %v433 = vsel %vm395, %v295, 0
    %v436 = vsel %vm395, %v296, 0
    %v439 = vsel %vm395, %v297, 0
    %v442 = vsel %vm395, %v298, 0
    %444 = vmatpush.msra.mxu0 0.0
    %445 = vmatpush.msra.mxu0 0.0
    %446 = vmatpush.msra.mxu0 0.0
    %447 = vmatpush.msra.mxu0 0.0
    %448 = vmatpush.msra.mxu0 0.0
    %449 = vmatpush.msra.mxu0 0.0
    %450 = vmatpush.msra.mxu0 0.0
    %451 = vmatpush.msra.mxu0 0.0
    %452 = vmatpush.msra.mxu0 %v282
    %453 = vmatpush.msra.mxu0 %v281
    %454 = vmatpush.msra.mxu0 %v280
    %455 = vmatpush.msra.mxu0 %v279
    %456 = vmatpush.msra.mxu0 %v278
    %457 = vmatpush.msra.mxu0 %v277
    %458 = vmatpush.msra.mxu0 %v276
    %459 = vmatpush.msra.mxu0 %v275
    %460 = vmatmul.f32.gmra.mxu0 %v397
    %v461 = vpop.f32.mrf.mxu0
    %v462 = vadd.f32 %v318, %v461
    %463 = vmatmul.f32.gmra.mxu0 %v400
    %v464 = vpop.f32.mrf.mxu0
    %v465 = vadd.f32 %v323, %v464
    %466 = vmatmul.f32.gmra.mxu0 %v403
    %v467 = vpop.f32.mrf.mxu0
    %v468 = vadd.f32 %v328, %v467
    %469 = vmatmul.f32.gmra.mxu0 %v406
    %v470 = vpop.f32.mrf.mxu0
    %v471 = vadd.f32 %v333, %v470
    %472 = vmatmul.f32.gmra.mxu0 %v409
    %v473 = vpop.f32.mrf.mxu0
    %v474 = vadd.f32 %v338, %v473
    %475 = vmatmul.f32.gmra.mxu0 %v412
    %v476 = vpop.f32.mrf.mxu0
    %v477 = vadd.f32 %v343, %v476
    %478 = vmatmul.f32.gmra.mxu0 %v415
    %v479 = vpop.f32.mrf.mxu0
    %v480 = vadd.f32 %v348, %v479
    %481 = vmatmul.f32.gmra.mxu0 %v418
    %v482 = vpop.f32.mrf.mxu0
    %v483 = vadd.f32 %v353, %v482
    %484 = vmatmul.f32.gmra.mxu0 %v421
    %v485 = vpop.f32.mrf.mxu0
    %v486 = vadd.f32 %v358, %v485
    %487 = vmatmul.f32.gmra.mxu0 %v424
    %v488 = vpop.f32.mrf.mxu0
    %v489 = vadd.f32 %v363, %v488
    %490 = vmatmul.f32.gmra.mxu0 %v427
    %v491 = vpop.f32.mrf.mxu0
    %v492 = vadd.f32 %v368, %v491
    %493 = vmatmul.f32.gmra.mxu0 %v430
    %v494 = vpop.f32.mrf.mxu0
    %v495 = vadd.f32 %v373, %v494
    %496 = vmatmul.f32.gmra.mxu0 %v433
    %v497 = vpop.f32.mrf.mxu0
    %v498 = vadd.f32 %v378, %v497
    %499 = vmatmul.f32.gmra.mxu0 %v436
    %v500 = vpop.f32.mrf.mxu0
    %v501 = vadd.f32 %v383, %v500
    %502 = vmatmul.f32.gmra.mxu0 %v439
    %v503 = vpop.f32.mrf.mxu0
    %v504 = vadd.f32 %v388, %v503
    %505 = vmatmul.f32.gmra.mxu0 %v442
    %v506 = vpop.f32.mrf.mxu0
    %v507 = vadd.f32 %v393, %v506
    %508 = vdwg.mxu0
    %v509 = vmax.f32 %v462, 0.0
    %v510 = vmax.f32 %v465, 0.0
    %v511 = vmax.f32 %v468, 0.0
    %v512 = vmax.f32 %v471, 0.0
    %v513 = vmax.f32 %v474, 0.0
    %v514 = vmax.f32 %v477, 0.0
    %v515 = vmax.f32 %v480, 0.0
    %v516 = vmax.f32 %v483, 0.0
    %v517 = vmax.f32 %v486, 0.0
    %v518 = vmax.f32 %v489, 0.0
    %v519 = vmax.f32 %v492, 0.0
    %v520 = vmax.f32 %v495, 0.0
    %v521 = vmax.f32 %v498, 0.0
    %v522 = vmax.f32 %v501, 0.0
    %v523 = vmax.f32 %v504, 0.0
    %v524 = vmax.f32 %v507, 0.0
    %v525 = vld [vmem:[%s1 + $0xe0] sm:$0xff]
    %v526 = vld [vmem:[%s1 + $0xe8] sm:$0xff]
    %v527 = vld [vmem:[%s1 + $0xf0] sm:$0xff]
    %v528 = vld [vmem:[%s1 + $0xf8] sm:$0xff]
    %v529 = vld [vmem:[%s1 + $0x100] sm:$0xff]
    %v530 = vld [vmem:[%s1 + $0x108] sm:$0xff]
    %v531 = vld [vmem:[%s1 + $0x110] sm:$0xff]
    %v532 = vld [vmem:[%s1 + $0x118] sm:$0xff]
    %v533 = vld [vmem:[%s2 + $0xe0] sm:$0xff]
    %v534 = vld [vmem:[%s2 + $0xe8] sm:$0xff]
    %v535 = vld [vmem:[%s2 + $0xf0] sm:$0xff]
    %v536 = vld [vmem:[%s2 + $0xf8] sm:$0xff]
    %v537 = vld [vmem:[%s2 + $0x100] sm:$0xff]
    %v538 = vld [vmem:[%s2 + $0x108] sm:$0xff]
    %v539 = vld [vmem:[%s2 + $0x110] sm:$0xff]
    %v540 = vld [vmem:[%s2 + $0x118] sm:$0xff]
    %542 = vset.pattern.permute.xlu0 0
    %543 = vperm.xlu0 %542, %v533
    %v544 = vpop.permute.xlu0 %543
    %547 = vset.pattern.permute.xlu0 0
    %548 = vperm.xlu0 %547, %v534
    %v549 = vpop.permute.xlu0 %548
    %552 = vset.pattern.permute.xlu0 0
    %553 = vperm.xlu0 %552, %v535
    %v554 = vpop.permute.xlu0 %553
    %557 = vset.pattern.permute.xlu0 0
    %558 = vperm.xlu0 %557, %v536
    %v559 = vpop.permute.xlu0 %558
    %562 = vset.pattern.permute.xlu0 0
    %563 = vperm.xlu0 %562, %v537
    %v564 = vpop.permute.xlu0 %563
    %567 = vset.pattern.permute.xlu0 0
    %568 = vperm.xlu0 %567, %v538
    %v569 = vpop.permute.xlu0 %568
    %572 = vset.pattern.permute.xlu0 0
    %573 = vperm.xlu0 %572, %v539
    %v574 = vpop.permute.xlu0 %573
    %577 = vset.pattern.permute.xlu0 0
    %578 = vperm.xlu0 %577, %v540
    %v579 = vpop.permute.xlu0 %578
    %581 = vmatpush.msra.mxu0 %v524
    %582 = vmatpush.msra.mxu0 %v523
    %583 = vmatpush.msra.mxu0 %v522
    %584 = vmatpush.msra.mxu0 %v521
    %585 = vmatpush.msra.mxu0 %v520
    %586 = vmatpush.msra.mxu0 %v519
    %587 = vmatpush.msra.mxu0 %v518
    %588 = vmatpush.msra.mxu0 %v517
    %589 = vmatpush.msra.mxu0 %v516
    %590 = vmatpush.msra.mxu0 %v515
    %591 = vmatpush.msra.mxu0 %v514
    %592 = vmatpush.msra.mxu0 %v513
    %593 = vmatpush.msra.mxu0 %v512
    %594 = vmatpush.msra.mxu0 %v511
    %595 = vmatpush.msra.mxu0 %v510
    %596 = vmatpush.msra.mxu0 %v509
    %597 = vmatmul.f32.gmra.mxu0 %v525
    %v598 = vpop.f32.mrf.mxu0
    %v599 = vadd.f32 %v544, %v598
    %600 = vmatmul.f32.gmra.mxu0 %v526
    %v601 = vpop.f32.mrf.mxu0
    %v602 = vadd.f32 %v549, %v601
    %603 = vmatmul.f32.gmra.mxu0 %v527
    %v604 = vpop.f32.mrf.mxu0
    %v605 = vadd.f32 %v554, %v604
    %606 = vmatmul.f32.gmra.mxu0 %v528
    %v607 = vpop.f32.mrf.mxu0
    %v608 = vadd.f32 %v559, %v607
    %609 = vmatmul.f32.gmra.mxu0 %v529
    %v610 = vpop.f32.mrf.mxu0
    %v611 = vadd.f32 %v564, %v610
    %612 = vmatmul.f32.gmra.mxu0 %v530
    %v613 = vpop.f32.mrf.mxu0
    %v614 = vadd.f32 %v569, %v613
    %615 = vmatmul.f32.gmra.mxu0 %v531
    %v616 = vpop.f32.mrf.mxu0
    %v617 = vadd.f32 %v574, %v616
    %618 = vmatmul.f32.gmra.mxu0 %v532
    %v619 = vpop.f32.mrf.mxu0
    %v620 = vadd.f32 %v579, %v619
    %621 = vdwg.mxu0
    %v622 = vmax.f32 %v599, 0.0
    %v623 = vmax.f32 %v602, 0.0
    %v624 = vmax.f32 %v605, 0.0
    %v625 = vmax.f32 %v608, 0.0
    %v626 = vmax.f32 %v611, 0.0
    %v627 = vmax.f32 %v614, 0.0
    %v628 = vmax.f32 %v617, 0.0
    %v629 = vmax.f32 %v620, 0.0
    %v630 = vld [vmem:[%s1 + $0x120] sm:$0xff]
    %v631 = vld [vmem:[%s1 + $0x128] sm:$0xff]
    %v632 = vld [vmem:[%s1 + $0x130] sm:$0xff]
    %v633 = vld [vmem:[%s1 + $0x138] sm:$0xff]
    %v634 = vld [vmem:[%s2 + $0x120] sm:$0xff]
    %v635 = vld [vmem:[%s2 + $0x128] sm:$0xff]
    %v636 = vld [vmem:[%s2 + $0x130] sm:$0xff]
    %v637 = vld [vmem:[%s2 + $0x138] sm:$0xff]
    %639 = vset.pattern.permute.xlu0 0
    %640 = vperm.xlu0 %639, %v634
    %v641 = vpop.permute.xlu0 %640
    %644 = vset.pattern.permute.xlu0 0
    %645 = vperm.xlu0 %644, %v635
    %v646 = vpop.permute.xlu0 %645
    %649 = vset.pattern.permute.xlu0 0
    %650 = vperm.xlu0 %649, %v636
    %v651 = vpop.permute.xlu0 %650
    %654 = vset.pattern.permute.xlu0 0
    %655 = vperm.xlu0 %654, %v637
    %v656 = vpop.permute.xlu0 %655
    %v659 = vsel %vm395, %v630, 0
    %v662 = vsel %vm395, %v631, 0
    %v665 = vsel %vm395, %v632, 0
    %v668 = vsel %vm395, %v633, 0
    %670 = vmatpush.msra.mxu0 0.0
    %671 = vmatpush.msra.mxu0 0.0
    %672 = vmatpush.msra.mxu0 0.0
    %673 = vmatpush.msra.mxu0 0.0
    %674 = vmatpush.msra.mxu0 0.0
    %675 = vmatpush.msra.mxu0 0.0
    %676 = vmatpush.msra.mxu0 0.0
    %677 = vmatpush.msra.mxu0 0.0
    %678 = vmatpush.msra.mxu0 %v629
    %679 = vmatpush.msra.mxu0 %v628
    %680 = vmatpush.msra.mxu0 %v627
    %681 = vmatpush.msra.mxu0 %v626
    %682 = vmatpush.msra.mxu0 %v625
    %683 = vmatpush.msra.mxu0 %v624
    %684 = vmatpush.msra.mxu0 %v623
    %685 = vmatpush.msra.mxu0 %v622
    %686 = vmatmul.f32.gmra.mxu0 %v659
    %v687 = vpop.f32.mrf.mxu0
    %v688 = vadd.f32 %v641, %v687
    %689 = vmatmul.f32.gmra.mxu0 %v662
    %v690 = vpop.f32.mrf.mxu0
    %v691 = vadd.f32 %v646, %v690
    %692 = vmatmul.f32.gmra.mxu0 %v665
    %v693 = vpop.f32.mrf.mxu0
    %v694 = vadd.f32 %v651, %v693
    %695 = vmatmul.f32.gmra.mxu0 %v668
    %v696 = vpop.f32.mrf.mxu0
    %v697 = vadd.f32 %v656, %v696
    %698 = vdwg.mxu0
    %v699 = vmax.f32 %v688, 0.0
    %v700 = vmax.f32 %v691, 0.0
    %v701 = vmax.f32 %v694, 0.0
    %v702 = vmax.f32 %v697, 0.0
    %v703 = vld [vmem:[%s1 + $0x140] sm:$0xff]
    %v704 = vld [vmem:[%s1 + $0x148] sm:$0xff]
    %v705 = vld [vmem:[%s2 + $0x140] sm:$0xff]
    %v706 = vld [vmem:[%s2 + $0x148] sm:$0xff]
    %708 = vset.pattern.permute.xlu0 0
    %709 = vperm.xlu0 %708, %v705
    %v710 = vpop.permute.xlu0 %709
    %713 = vset.pattern.permute.xlu0 0
    %714 = vperm.xlu0 %713, %v706
    %v715 = vpop.permute.xlu0 %714
    %v718 = vsel %vm209, %v703, 0
    %v721 = vsel %vm209, %v704, 0
    %723 = vmatpush.msra.mxu0 0.0
    %724 = vmatpush.msra.mxu0 0.0
    %725 = vmatpush.msra.mxu0 0.0
    %726 = vmatpush.msra.mxu0 0.0
    %727 = vmatpush.msra.mxu0 0.0
    %728 = vmatpush.msra.mxu0 0.0
    %729 = vmatpush.msra.mxu0 0.0
    %730 = vmatpush.msra.mxu0 0.0
    %731 = vmatpush.msra.mxu0 0.0
    %732 = vmatpush.msra.mxu0 0.0
    %733 = vmatpush.msra.mxu0 0.0
    %734 = vmatpush.msra.mxu0 0.0
    %735 = vmatpush.msra.mxu0 %v702
    %736 = vmatpush.msra.mxu0 %v701
    %737 = vmatpush.msra.mxu0 %v700
    %738 = vmatpush.msra.mxu0 %v699
    %739 = vmatmul.f32.gmra.mxu0 %v718
    %v740 = vpop.f32.mrf.mxu0
    %v741 = vadd.f32 %v710, %v740
    %742 = vmatmul.f32.gmra.mxu0 %v721
    %v743 = vpop.f32.mrf.mxu0
    %v744 = vadd.f32 %v715, %v743
    %745 = vdwg.mxu0
    %v746 = vmax.f32 %v741, 0.0
    %v747 = vmax.f32 %v744, 0.0
    %v748 = vld [vmem:[%s1 + $0x150] sm:$0xff]
    %v749 = vld [vmem:[%s2 + $0x150] sm:$0xff]
    %751 = vset.pattern.permute.xlu0 0
    %752 = vperm.xlu0 %751, %v749
    %v753 = vpop.permute.xlu0 %752
    %vm755 = vcmask 130048
    %v757 = vsel %vm755, %v748, 0
    %759 = vmatpush.msra.mxu0 0.0
    %760 = vmatpush.msra.mxu0 0.0
    %761 = vmatpush.msra.mxu0 0.0
    %762 = vmatpush.msra.mxu0 0.0
    %763 = vmatpush.msra.mxu0 0.0
    %764 = vmatpush.msra.mxu0 0.0
    %765 = vmatpush.msra.mxu0 0.0
    %766 = vmatpush.msra.mxu0 0.0
    %767 = vmatpush.msra.mxu0 0.0
    %768 = vmatpush.msra.mxu0 0.0
    %769 = vmatpush.msra.mxu0 0.0
    %770 = vmatpush.msra.mxu0 0.0
    %771 = vmatpush.msra.mxu0 0.0
    %772 = vmatpush.msra.mxu0 0.0
    %773 = vmatpush.msra.mxu0 %v747
    %774 = vmatpush.msra.mxu0 %v746
    %775 = vmatmul.f32.gmra.mxu0 %v757
    %v776 = vpop.f32.mrf.mxu0
    %v777 = vadd.f32 %v753, %v776
    %778 = vdwg.mxu0
    %v779 = vmax.f32 %v777, 0.0
    %v780 = vld [vmem:[%s1 + $0x158] sm:$0x1]
    %v781 = vld [vmem:[%s2 + $0x158] sm:$0x1]
    %783 = vset.pattern.permute.xlu0 0
    %784 = vperm.xlu0 %783, %v781
    %v785 = vpop.permute.xlu0 %784
    %vm787 = vcmask 64512
    %v789 = vsel %vm787, %v780, 0
    %791 = vmatpush.msra.mxu0 0.0
    %792 = vmatpush.msra.mxu0 0.0
    %793 = vmatpush.msra.mxu0 0.0
    %794 = vmatpush.msra.mxu0 0.0
    %795 = vmatpush.msra.mxu0 0.0
    %796 = vmatpush.msra.mxu0 0.0
    %797 = vmatpush.msra.mxu0 0.0
    %798 = vmatpush.msra.mxu0 0.0
    %799 = vmatpush.msra.mxu0 0.0
    %800 = vmatpush.msra.mxu0 0.0
    %801 = vmatpush.msra.mxu0 0.0
    %802 = vmatpush.msra.mxu0 0.0
    %803 = vmatpush.msra.mxu0 0.0
    %804 = vmatpush.msra.mxu0 0.0
    %805 = vmatpush.msra.mxu0 0.0
    %806 = vmatpush.msra.mxu0 %v779
    %807 = vmatmul.f32.gmra.mxu0 %v789
    %v808 = vpop.f32.mrf.mxu0
    %v809 = vadd.f32 %v785, %v808
    %810 = vdwg.mxu0
    %v811 = vxor.u32 %v809, 2147483648
    %v812 = vmul.f32 %v811, 1.442695
    %v813 = vpow.pop %v812
    %v814 = vadd.f32 %v813, 1.0
    %v815 = vrcp.pop %v814
    %v816 = vmul.f32 %v814, %v815
    %v817 = vsub.f32 1.0, %v816
    %v818 = vmul.f32 %v815, %v817
    %v819 = vadd.f32 %v815, %v818
    %vm820 = vweird.f32 %v814
    %vm821 = vweird.f32 %v815
    %vm822 = vmor %vm820, %vm821
    %v823 = vsel %vm822, %v815, %v819
    %v824 = vand.u32 2147483647, %v814
    %vm825 = vcmp.eq.f32.partialorder %v824, 8.507059e+37
    %v826 = vand.u32 %v814, 2147483648
    %v827 = vor.u32 1.1754944e-38, %v826
    %v828 = vsel %vm825, %v827, %v823
    %v829 = vmul.f32 1.0, %v828
    %830 = vst [vmem:[#allocation2] sm:$0x1] %v829
    // Predicated region
    $region14: #{tpu_custom_call.1} parent=1 // pred_check
      _
    $region15: #{tpu_custom_call.1} parent=1 // pred_check_branch
      %832 = sbr.rel (0) target = $region17
    $region16: #{tpu_custom_call.1} parent=1 // pred_region
      %834 = vsyncadd [#allocation3], 0
      %s836 = sshll.u32 [#allocation2], 4
      %s837 = int_to_ptr.vmem [resolvable:$true] %s836
      %s838 = sshll.u32 %s3, 4
      %s839 = int_to_ptr.hbm [resolvable:$true] %s838
      %841 = dma.vmem_to_hbm [thread:$0]  %s837, 16, %s839, [#allocation3]
    $region17: #{tpu_custom_call.1} parent=1 // pred_fallthru
      _
    // Predicated region
    $region18: #{tpu_custom_call.1} parent=1 // pred_check
      _
    $region19: #{tpu_custom_call.1} parent=1 // pred_check_branch
      %843 = sbr.rel (0) target = $region21
    $region20: #{tpu_custom_call.1} parent=1 // pred_region
      %845 = dma.done [#allocation3], 16
    $region21: #{tpu_custom_call.1} parent=1 // pred_fallthru
      _
    %846 = vsyncpa [#allocation3], 1

</llo_original>
